<compile_context>
chip_gen: v6e
topology: v6e:2x2x1
jax: 0.10.0
libtpu: 0.0.40
codegen_flags: <defaults>
</compile_context>

<pallas_src>
import functools
import math

import jax
import jax.numpy as jnp
from jax.experimental import pallas as pl
from jax.experimental.pallas import tpu as pltpu


def _round_up(x, m):
    return ((x + m - 1) // m) * m


def _cdiv(a, b):
    return (a + b - 1) // b


def _multilabel_kernel(out_ref, tgt_ref, acc_ref, *, thr_logit, n_valid, mask_rows):
    split = pl.program_id(0)          # (optional) core-parallel batch split
    step = pl.program_id(1)           # sequential batch tiles within a split

    @pl.when(step == 0)
    def _init():
        acc_ref[...] = jnp.zeros_like(acc_ref)

    logits = out_ref[...]             # (tile, c), native dtype (f32 / bf16)
    target = tgt_ref[...]             # (tile, c), native dtype (float / int8)
    tile, c = logits.shape
    cdt = jnp.bfloat16                # {0,1} mask / MXU operand dtype

    # Hot path: threshold compare in logit space (sigmoid is monotone), native
    # dtype compares only -> NaN/garbage in the padded tail cannot propagate.
    # TODO(synk): only the module's default activation (sigmoid) is supported
    # in-kernel; an arbitrary `activation` callable is not translated.
    pred = (logits >= thr_logit).astype(cdt)          # (tile, c) in {0,1}
    trues = (target == 1).astype(cdt)                 # (tile, c) in {0,1}

    # Row validity folded into the matmul LHS (instead of masking full tiles).
    if mask_rows:
        g_row0 = (split * pl.num_programs(1) + step) * tile
        row_ids = jax.lax.broadcasted_iota(jnp.int32, (1, tile), 1) + g_row0
        lhs = (row_ids < n_valid).astype(cdt)          # (1, tile)
    else:
        lhs = jnp.ones((1, tile), cdt)

    # Batch (sublane) per-class reductions on the otherwise-idle MXU,
    # bf16 operands with exact f32 accumulation.
    tp = jnp.dot(lhs, pred * trues, preferred_element_type=jnp.float32)   # (1, c)
    sp = jnp.dot(lhs, pred, preferred_element_type=jnp.float32)           # (1, c)
    st = jnp.dot(lhs, trues, preferred_element_type=jnp.float32)          # (1, c)

    # zero-one: rows where sigmoid(logits) == target exactly (PyTorch parity);
    # the cross-lane reduce rides the MXU as a mismatch-count matmul.
    probs = jax.nn.sigmoid(logits.astype(jnp.float32))
    neq = (probs != target.astype(jnp.float32)).astype(cdt)               # (tile, c)
    mism = jnp.dot(neq, jnp.ones((c, 1), cdt),
                   preferred_element_type=jnp.float32)                    # (tile, 1)
    row_match = (mism == 0.0).astype(cdt)                                 # (tile, 1)
    zo = jnp.dot(lhs, row_match, preferred_element_type=jnp.float32)      # (1, 1)

    # Fused accumulator slab (rows: tp, sum(pred), sum(trues), zero-one count).
    acc_ref[0:1, :] += tp
    acc_ref[1:2, :] += sp
    acc_ref[2:3, :] += st
    acc_ref[3:4, 0:1] += zo


def _choose_tile(n, c, in_itemsize_sum, num_splits, tile_n=None):
    """Pick the batch-tile size from the actual VMEM footprint (v7x-safe)."""
    n_rows8 = _round_up(n, 8)
    if tile_n is not None:
        return min(max(8, (int(tile_n) // 8) * 8), n_rows8)
    c_lanes = _round_up(c, 128)
    # per-row VMEM: 2x double-buffered inputs + ~6 f32-sized full-tile temps
    per_row = c_lanes * (2 * in_itemsize_sum + 6 * 4)
    budget = 40 * 1024 * 1024          # conservative vs v7x's 64 MiB physical VMEM
    tile = max(32, min(2048, ((budget // per_row) // 32) * 32))
    rows_per_split = _cdiv(n, num_splits)
    if num_splits == 1 and rows_per_split <= tile:
        return n                        # single full-batch block (full dim is always legal)
    return min(tile, _round_up(rows_per_split, 32), n_rows8)


def multilabel_metrics(output, target, *, threshold=0.5, epsilon=1e-8,
                       tile_n=None, num_splits=1):
    """JAX/Pallas equivalent of MultiLabel.forward.

    output: logits (N, C), any float dtype (bf16 recommended for HBM traffic).
    target: (N, C) 0/1 labels (float or int8), or integer class indices (N,).
    num_splits: leave at 1 on v5e/v6e (single TensorCore); 2 on v7x.
    """
    n, c = output.shape
    num_splits = max(1, int(num_splits))

    if target.shape != output.shape:
        if jnp.issubdtype(target.dtype, jnp.integer):
            # scatter_-style one-hot expansion; int8 keeps HBM traffic low.
            # TODO(synk): could be fused in-kernel from a prefetched index vector.
            target = jax.nn.one_hot(target.reshape(-1), c, dtype=jnp.int8)
        else:
            raise ValueError("unsupported target dtype/shape combination")

    in_itemsize_sum = output.dtype.itemsize + target.dtype.itemsize
    tile = _choose_tile(n, c, in_itemsize_sum, num_splits, tile_n)
    steps_per_split = _cdiv(n, tile * num_splits)
    last_block = _cdiv(n, tile) - 1
    mask_rows = (num_splits * steps_per_split * tile != n)

    # Threshold moved into logit space (exact for the default threshold=0.5).
    thr_logit = math.log(threshold / (1.0 - threshold))

    # VMEM budget derived from the real block sizes (double-buffered inputs,
    # full-tile intermediates, output slab) with 25% headroom, capped at 64 MiB.
    tile8 = _round_up(tile, 8)
    c_lanes = _round_up(c, 128)
    needed = (2 * tile8 * c_lanes * in_itemsize_sum      # 2-deep pipelined inputs
              + 6 * tile8 * c_lanes * 4                  # full-tile temps (f32-equiv)
              + 2 * 8 * c_lanes * 4)                     # accumulator slab
    vmem_limit = int(min(64 * 1024 * 1024, max(16 * 1024 * 1024, needed * 5 // 4)))

    kernel = functools.partial(_multilabel_kernel, thr_logit=thr_logit,
                               n_valid=n, mask_rows=mask_rows)

    def _in_map(s, i):
        # Clamp so a fully out-of-range split block re-reads the last valid
        # block; its rows are then zeroed by the in-kernel row mask.
        return (jnp.minimum(s * steps_per_split + i, last_block), 0)

    acc = pl.pallas_call(
        kernel,
        out_shape=jax.ShapeDtypeStruct((num_splits * 8, c), jnp.float32),
        grid_spec=pltpu.PrefetchScalarGridSpec(
            num_scalar_prefetch=0,
            grid=(num_splits, steps_per_split),
            in_specs=[
                pl.BlockSpec((tile, c), _in_map),
                pl.BlockSpec((tile, c), _in_map),
            ],
            out_specs=pl.BlockSpec((8, c), lambda s, i: (s, 0)),
        ),
        compiler_params=pltpu.CompilerParams(
            dimension_semantics=("parallel", "arbitrary"),
            vmem_limit_bytes=vmem_limit),
        cost_estimate=pl.CostEstimate(
            flops=10 * n * c,
            transcendentals=n * c,
            bytes_accessed=n * c * in_itemsize_sum + num_splits * 8 * c * 4),
    )(output, target)

    # merge per-split partial accumulators
    acc = acc.reshape(num_splits, 8, c).sum(axis=0)
    tp = acc[0]
    sp = acc[1]            # per-class count of positive predictions
    st = acc[2]            # per-class count of positive targets
    zo_count = acc[3, 0]

    nf = jnp.float32(n)
    fp = sp - tp
    fn = st - tp
    tn = nf - sp - st + tp

    eps = epsilon
    tp = tp + eps
    fp = fp + eps
    tn = tn + eps
    fn = fn + eps

    zero_one = zo_count / n

    # ---- tiny O(C) scalar metric math (plain-JAX glue) ----
    precision_c = tp / (tp + fp + eps)
    recall_c = tp / (tp + fn + eps)
    f1_c = 2.0 * precision_c * recall_c / (precision_c + recall_c + eps)
    precision_per_class = precision_c.mean()
    recall_per_class = recall_c.mean()
    f1score_per_class = f1_c.mean()

    tp_s, tn_s, fp_s, fn_s = tp.sum(), tn.sum(), fp.sum(), fn.sum()
    accuracy = (tp_s + tn_s) / (tp_s + tn_s + fp_s + fn_s)
    precision = tp_s / (tp_s + fp_s + eps)
    recall = tp_s / (tp_s + fn_s + eps)
    f1score = 2.0 * precision * recall / (precision + recall + eps)

    return {
        'zero-one': zero_one,
        'accuracy': accuracy,
        'precision': precision,
        'recall': recall,
        'f1score': f1score,
        'precision_per_class': precision_per_class,
        'recall_per_class': recall_per_class,
        'f1score_per_class': f1score_per_class,
    }


def _reference_metrics(logits, target, threshold=0.5, eps=1e-8):
    """Pure-jnp replica of MultiLabel.forward for checking."""
    probs = jax.nn.sigmoid(logits.astype(jnp.float32))
    t = target.astype(jnp.float32)
    pred = (probs >= threshold).astype(jnp.float32)
    trues = (t == 1.0).astype(jnp.float32)
    falses = 1.0 - trues
    tp = (pred * trues).sum(0) + eps
    fp = (pred * falses).sum(0) + eps
    tn = ((1.0 - pred) * falses).sum(0) + eps
    fn = ((1.0 - pred) * trues).sum(0) + eps
    zo = jnp.all(probs == t, axis=1).sum() / logits.shape[0]
    prec_c = tp / (tp + fp + eps)
    rec_c = tp / (tp + fn + eps)
    f1_c = 2.0 * prec_c * rec_c / (prec_c + rec_c + eps)
    tps, tns, fps, fns = tp.sum(), tn.sum(), fp.sum(), fn.sum()
    acc = (tps + tns) / (tps + tns + fps + fns)
    prec = tps / (tps + fps + eps)
    rec = tps / (tps + fns + eps)
    f1 = 2.0 * prec * rec / (prec + rec + eps)
    return {'zero-one': zo, 'accuracy': acc, 'precision': prec, 'recall': rec,
            'f1score': f1, 'precision_per_class': prec_c.mean(),
            'recall_per_class': rec_c.mean(), 'f1score_per_class': f1_c.mean()}


def _check(got, ref):
    for name in ref:
        assert jnp.allclose(got[name], ref[name], rtol=1e-5, atol=1e-6), (
            name, got[name], ref[name])


if __name__ == "__main__":
    key = jax.random.PRNGKey(0)
    ks = jax.random.split(key, 8)

    # case 1: f32 logits + float multilabel targets, single block, no masking.
    # Two rows are saturated (sigmoid == 1.0 exactly) so zero-one > 0.
    N, C = 8, 16
    logits = jax.random.normal(ks[0], (N, C), dtype=jnp.float32)
    target = (jax.random.uniform(ks[1], (N, C)) > 0.5).astype(jnp.float32)
    logits = logits.at[0].set(40.0).at[5].set(40.0)
    target = target.at[0].set(1.0).at[5].set(1.0)
    m1 = multilabel_metrics(logits, target)
    m1 = jax.tree_util.tree_map(jax.block_until_ready, m1)
    _check(m1, _reference_metrics(logits, target))

    # case 2: bf16 logits + int8 targets, ragged batch, 2-way split
    # (exercises in-kernel row masking, clamped split blocks, split merge).
    N2, C2 = 13, 20
    logits2 = jax.random.normal(ks[2], (N2, C2), dtype=jnp.float32).astype(jnp.bfloat16)
    target2 = (jax.random.uniform(ks[3], (N2, C2)) > 0.5).astype(jnp.int8)
    m2 = multilabel_metrics(logits2, target2, num_splits=2)
    m2 = jax.tree_util.tree_map(jax.block_until_ready, m2)
    _check(m2, _reference_metrics(logits2, target2))

    # case 3: multi-step accumulation with a ragged last tile (no wrapper pad).
    N3, C3 = 200, 96
    logits3 = jax.random.normal(ks[4], (N3, C3), dtype=jnp.float32)
    target3 = (jax.random.uniform(ks[5], (N3, C3)) > 0.5).astype(jnp.float32)
    m3 = multilabel_metrics(logits3, target3, tile_n=64)
    m3 = jax.tree_util.tree_map(jax.block_until_ready, m3)
    _check(m3, _reference_metrics(logits3, target3))

    # case 4: integer class-index targets (scatter_-style one-hot expansion).
    N4, C4 = 16, 10
    logits4 = jax.random.normal(ks[6], (N4, C4), dtype=jnp.float32)
    idx4 = jax.random.randint(ks[7], (N4,), 0, C4, dtype=jnp.int32)
    m4 = multilabel_metrics(logits4, idx4)
    m4 = jax.tree_util.tree_map(jax.block_until_ready, m4)
    _check(m4, _reference_metrics(logits4, jax.nn.one_hot(idx4, C4, dtype=jnp.float32)))

    print("KERNEL_OK")
</pallas_src>

<mosaic_0001>
module attributes {stable_mosaic.version = 11 : i64} {
  func.func @_multilabel_kernel(%arg0: i32, %arg1: i32, %arg2: memref<8x16xf32, #tpu.memory_space<vmem>>, %arg3: memref<8x16xf32, #tpu.memory_space<vmem>>, %arg4: memref<8x16xf32, #tpu.memory_space<vmem>>) attributes {dimension_semantics = [#tpu.dimension_semantics<parallel>, #tpu.dimension_semantics<arbitrary>], iteration_bounds = array<i64: 1, 1>, scalar_prefetch = 0 : i64, scratch_operands = 0 : i64, tpu.core_type = #tpu.core_type<tc>, window_params = [{transform_indices = @transform_0, window_bounds = array<i64: 8, 16>}, {transform_indices = @transform_1, window_bounds = array<i64: 8, 16>}, {transform_indices = @transform_2, window_bounds = array<i64: 8, 16>}]} {
    %c0_i32 = arith.constant 0 : i32
    %0 = arith.cmpi eq, %arg1, %c0_i32 : i32
    %1 = arith.extui %0 : i1 to i32
    %c0_i32_0 = arith.constant 0 : i32
    %2 = arith.cmpi ne, %1, %c0_i32_0 : i32
    scf.if %2 {
      %cst_27 = arith.constant 0.000000e+00 : f32
      %49 = vector.broadcast %cst_27 : f32 to vector<8x16xf32>
      %c0_28 = arith.constant 0 : index
      %c0_29 = arith.constant 0 : index
      %50 = vector.load %arg4[%c0_28, %c0_29] : memref<8x16xf32, #tpu.memory_space<vmem>>, vector<8x16xf32>
      tpu.vector_store %arg4[%c0_28, %c0_29], %49 {strides = array<i32>} : memref<8x16xf32, #tpu.memory_space<vmem>>, vector<8x16xf32>,
    } else {
    }
    %c0 = arith.constant 0 : index
    %c0_1 = arith.constant 0 : index
    %3 = vector.load %arg2[%c0, %c0_1] : memref<8x16xf32, #tpu.memory_space<vmem>>, vector<8x16xf32>
    %c0_2 = arith.constant 0 : index
    %c0_3 = arith.constant 0 : index
    %4 = vector.load %arg3[%c0_2, %c0_3] : memref<8x16xf32, #tpu.memory_space<vmem>>, vector<8x16xf32>
    %cst = arith.constant 0.000000e+00 : f32
    %5 = vector.broadcast %cst : f32 to vector<8x16xf32>
    %6 = arith.cmpf oge, %3, %5 : vector<8x16xf32>
    %7 = arith.extui %6 : vector<8x16xi1> to vector<8x16xi32>
    %8 = arith.sitofp %7 : vector<8x16xi32> to vector<8x16xf32>
    %9 = arith.truncf %8 : vector<8x16xf32> to vector<8x16xbf16>
    %cst_4 = arith.constant 1.000000e+00 : f32
    %10 = vector.broadcast %cst_4 : f32 to vector<8x16xf32>
    %11 = arith.cmpf oeq, %4, %10 : vector<8x16xf32>
    %12 = arith.extui %11 : vector<8x16xi1> to vector<8x16xi32>
    %13 = arith.sitofp %12 : vector<8x16xi32> to vector<8x16xf32>
    %14 = arith.truncf %13 : vector<8x16xf32> to vector<8x16xbf16>
    %cst_5 = arith.constant 1.000000e+00 : bf16
    %15 = vector.broadcast %cst_5 : bf16 to vector<1x8xbf16>
    %16 = arith.mulf %9, %14 : vector<8x16xbf16>
    %cst_6 = arith.constant dense<0.000000e+00> : vector<1x16xf32>
    %17 = tpu.matmul %15, %16, %cst_6 {dimension_numbers = #tpu.dot_dimension_numbers<[1], [0], [0], [1], [0, 0, 1, 1], [], []>} : vector<1x8xbf16>, vector<8x16xbf16>, vector<1x16xf32> -> vector<1x16xf32>
    %cst_7 = arith.constant dense<0.000000e+00> : vector<1x16xf32>
    %18 = tpu.matmul %15, %9, %cst_7 {dimension_numbers = #tpu.dot_dimension_numbers<[1], [0], [0], [1], [0, 0, 1, 1], [], []>} : vector<1x8xbf16>, vector<8x16xbf16>, vector<1x16xf32> -> vector<1x16xf32>
    %cst_8 = arith.constant dense<0.000000e+00> : vector<1x16xf32>
    %19 = tpu.matmul %15, %14, %cst_8 {dimension_numbers = #tpu.dot_dimension_numbers<[1], [0], [0], [1], [0, 0, 1, 1], [], []>} : vector<1x8xbf16>, vector<8x16xbf16>, vector<1x16xf32> -> vector<1x16xf32>
    %20 = arith.negf %3 : vector<8x16xf32>
    %21 = math.exp %20 : vector<8x16xf32>
    %cst_9 = arith.constant 1.000000e+00 : f32
    %22 = vector.broadcast %cst_9 : f32 to vector<8x16xf32>
    %23 = arith.addf %22, %21 : vector<8x16xf32>
    %24 = arith.divf %22, %23 : vector<8x16xf32>
    %25 = arith.cmpf one, %24, %4 : vector<8x16xf32>
    %26 = arith.extui %25 : vector<8x16xi1> to vector<8x16xi32>
    %27 = arith.sitofp %26 : vector<8x16xi32> to vector<8x16xf32>
    %28 = arith.truncf %27 : vector<8x16xf32> to vector<8x16xbf16>
    %cst_10 = arith.constant 1.000000e+00 : bf16
    %29 = vector.broadcast %cst_10 : bf16 to vector<16x1xbf16>
    %cst_11 = arith.constant dense<0.000000e+00> : vector<8x1xf32>
    %30 = tpu.matmul %28, %29, %cst_11 {dimension_numbers = #tpu.dot_dimension_numbers<[1], [0], [0], [1], [0, 0, 1, 1], [], []>} : vector<8x16xbf16>, vector<16x1xbf16>, vector<8x1xf32> -> vector<8x1xf32>
    %cst_12 = arith.constant 0.000000e+00 : f32
    %31 = vector.broadcast %cst_12 : f32 to vector<8x1xf32>
    %32 = arith.cmpf oeq, %30, %31 : vector<8x1xf32>
    %33 = arith.extui %32 : vector<8x1xi1> to vector<8x1xi32>
    %34 = arith.sitofp %33 : vector<8x1xi32> to vector<8x1xf32>
    %35 = arith.truncf %34 : vector<8x1xf32> to vector<8x1xbf16>
    %cst_13 = arith.constant dense<0.000000e+00> : vector<1x1xf32>
    %36 = tpu.matmul %15, %35, %cst_13 {dimension_numbers = #tpu.dot_dimension_numbers<[1], [0], [0], [1], [0, 0, 1, 1], [], []>} : vector<1x8xbf16>, vector<8x1xbf16>, vector<1x1xf32> -> vector<1x1xf32>
    %c0_14 = arith.constant 0 : index
    %c0_15 = arith.constant 0 : index
    %37 = vector.load %arg4[%c0_14, %c0_15] : memref<8x16xf32, #tpu.memory_space<vmem>>, vector<1x16xf32>
    %38 = arith.addf %37, %17 : vector<1x16xf32>
    %c0_16 = arith.constant 0 : index
    %c0_17 = arith.constant 0 : index
    %39 = vector.load %arg4[%c0_16, %c0_17] : memref<8x16xf32, #tpu.memory_space<vmem>>, vector<1x16xf32>
    tpu.vector_store %arg4[%c0_16, %c0_17], %38 {strides = array<i32>} : memref<8x16xf32, #tpu.memory_space<vmem>>, vector<1x16xf32>,
    %c1 = arith.constant 1 : index
    %c0_18 = arith.constant 0 : index
    %40 = vector.load %arg4[%c1, %c0_18] : memref<8x16xf32, #tpu.memory_space<vmem>>, vector<1x16xf32>
    %41 = arith.addf %40, %18 : vector<1x16xf32>
    %c1_19 = arith.constant 1 : index
    %c0_20 = arith.constant 0 : index
    %42 = vector.load %arg4[%c1_19, %c0_20] : memref<8x16xf32, #tpu.memory_space<vmem>>, vector<1x16xf32>
    tpu.vector_store %arg4[%c1_19, %c0_20], %41 {strides = array<i32>} : memref<8x16xf32, #tpu.memory_space<vmem>>, vector<1x16xf32>,
    %c2 = arith.constant 2 : index
    %c0_21 = arith.constant 0 : index
    %43 = vector.load %arg4[%c2, %c0_21] : memref<8x16xf32, #tpu.memory_space<vmem>>, vector<1x16xf32>
    %44 = arith.addf %43, %19 : vector<1x16xf32>
    %c2_22 = arith.constant 2 : index
    %c0_23 = arith.constant 0 : index
    %45 = vector.load %arg4[%c2_22, %c0_23] : memref<8x16xf32, #tpu.memory_space<vmem>>, vector<1x16xf32>
    tpu.vector_store %arg4[%c2_22, %c0_23], %44 {strides = array<i32>} : memref<8x16xf32, #tpu.memory_space<vmem>>, vector<1x16xf32>,
    %c3 = arith.constant 3 : index
    %c0_24 = arith.constant 0 : index
    %46 = vector.load %arg4[%c3, %c0_24] : memref<8x16xf32, #tpu.memory_space<vmem>>, vector<1x1xf32>
    %47 = arith.addf %46, %36 : vector<1x1xf32>
    %c3_25 = arith.constant 3 : index
    %c0_26 = arith.constant 0 : index
    %48 = vector.load %arg4[%c3_25, %c0_26] : memref<8x16xf32, #tpu.memory_space<vmem>>, vector<1x1xf32>
    tpu.vector_store %arg4[%c3_25, %c0_26], %47 {strides = array<i32>} : memref<8x16xf32, #tpu.memory_space<vmem>>, vector<1x1xf32>,
    return
  }
  func.func @transform_0(%arg0: i32, %arg1: i32) -> (i32, i32) {
    %c1_i32 = arith.constant 1 : i32
    %0 = arith.muli %arg0, %c1_i32 : i32
    %1 = arith.addi %0, %arg1 : i32
    %c0_i32 = arith.constant 0 : i32
    %2 = arith.minsi %1, %c0_i32 : i32
    %c0_i32_0 = arith.constant 0 : i32
    %c0_i32_1 = arith.constant 0 : i32
    return %2, %c0_i32_0 : i32, i32
  }
  func.func @transform_1(%arg0: i32, %arg1: i32) -> (i32, i32) {
    %c1_i32 = arith.constant 1 : i32
    %0 = arith.muli %arg0, %c1_i32 : i32
    %1 = arith.addi %0, %arg1 : i32
    %c0_i32 = arith.constant 0 : i32
    %2 = arith.minsi %1, %c0_i32 : i32
    %c0_i32_0 = arith.constant 0 : i32
    %c0_i32_1 = arith.constant 0 : i32
    return %2, %c0_i32_0 : i32, i32
  }
  func.func @transform_2(%arg0: i32, %arg1: i32) -> (i32, i32) {
    %c0_i32 = arith.constant 0 : i32
    %c0_i32_0 = arith.constant 0 : i32
    return %arg0, %c0_i32 : i32, i32
  }
}

</mosaic_0001>

<llo_original>
// kernel: tpu_custom_call.1
$region0: #{tpu_custom_call.1}
  #allocation0 [shape = 'u32[]', space=smem, size = 0x4, offset = 0x4, fixed_abs, tag = 'smem constant byte address 0x4 - core index']
  #allocation1 [shape = 'u32[144,128]{1,0:T(1,128)}', space=vmem, size = 0x12000, scoped, tag = 'internal scratch']
  %s0 = inlined_call_operand.hbm [shape: f32[8,16], index: 0, kind: input, shape index: {}]
  %s1 = inlined_call_operand.hbm [shape: f32[8,16], index: 1, kind: input, shape index: {}]
  %s2 = inlined_call_operand.hbm [shape: f32[8,16], index: 2, kind: output, shape index: {}]
  %s3 = sld [smem:[#allocation0]]
  $region30: #{tpu_custom_call.1} parent=0
    _
  %s5 = ssub.s32 1, %s3
  %s6 = scalar_select 0, %s5, %s3
  $region1: #{tpu_custom_call.1} parent=0
    #allocation2 [shape = 'u8[4096]{0}', space=vmem, size = 0x1000, scoped, tag = 'input window, operand 0, single buffered']
    #allocation3 [shape = 's32[1]{0}', space=sflag, size = 0x4, scoped, tag = 'scoped memory for tpu_custom_call.1']
    #allocation4 [shape = 's32[1]{0}', space=sflag, size = 0x4, scoped, tag = 'scoped memory for tpu_custom_call.1']
    #allocation5 [shape = 'u8[4096]{0}', space=vmem, size = 0x1000, scoped, tag = 'input window, operand 1, single buffered']
    #allocation6 [shape = 's32[1]{0}', space=sflag, size = 0x4, scoped, tag = 'scoped memory for tpu_custom_call.1']
    #allocation7 [shape = 'u8[4096]{0}', space=vmem, size = 0x1000, scoped, tag = 'output window, operand 0, single buffered']
    %7 = vsyncpa [#allocation3], 0
    %8 = vsyncpa [#allocation6], 0
    %9 = vsyncpa [#allocation4], 0
    // Predicated region
    $region2: #{tpu_custom_call.1} parent=1 // pred_check
      _
    $region3: #{tpu_custom_call.1} parent=1 // pred_check_branch
      %11 = sbr.rel (0) target = $region5
    $region4: #{tpu_custom_call.1} parent=1 // pred_region
      %s12 = sadd.s32 0, 0
      %p13 = scmp.lt.s32.totalorder %s12, 0
      %s14 = scalar_select %p13, %s12, 0
      %s16 = ssub.s32 128, 128
      %17 = vsyncadd [#allocation3], %s16
      %s18 = smul.addr %s14, 128
      %s19 = scalar_lea.hbm %s0, %s18
      %s21 = sshll.u32 [#allocation2], 4
      %s22 = int_to_ptr.vmem [resolvable:$true] %s21
      %24 = dma.hbm_to_vmem [thread:$0]  %s19, 128, %s22, [#allocation3]
    $region5: #{tpu_custom_call.1} parent=1 // pred_fallthru
      _
    // Predicated region
    $region6: #{tpu_custom_call.1} parent=1 // pred_check
      _
    $region7: #{tpu_custom_call.1} parent=1 // pred_check_branch
      %26 = sbr.rel (0) target = $region9
    $region8: #{tpu_custom_call.1} parent=1 // pred_region
      %s27 = sadd.s32 0, 0
      %p28 = scmp.lt.s32.totalorder %s27, 0
      %s29 = scalar_select %p28, %s27, 0
      %s31 = ssub.s32 128, 128
      %32 = vsyncadd [#allocation6], %s31
      %s33 = smul.addr %s29, 128
      %s34 = scalar_lea.hbm %s1, %s33
      %s36 = sshll.u32 [#allocation5], 4
      %s37 = int_to_ptr.vmem [resolvable:$true] %s36
      %39 = dma.hbm_to_vmem [thread:$0]  %s34, 128, %s37, [#allocation6]
    $region9: #{tpu_custom_call.1} parent=1 // pred_fallthru
      _
    // Predicated region
    $region10: #{tpu_custom_call.1} parent=1 // pred_check
      _
    $region11: #{tpu_custom_call.1} parent=1 // pred_check_branch
      %41 = sbr.rel (0) target = $region13
    $region12: #{tpu_custom_call.1} parent=1 // pred_region
      %42 = dma.done [#allocation3], 128
    $region13: #{tpu_custom_call.1} parent=1 // pred_fallthru
      _
    // Predicated region
    $region14: #{tpu_custom_call.1} parent=1 // pred_check
      _
    $region15: #{tpu_custom_call.1} parent=1 // pred_check_branch
      %44 = sbr.rel (0) target = $region17
    $region16: #{tpu_custom_call.1} parent=1 // pred_region
      %45 = dma.done [#allocation6], 128
    $region17: #{tpu_custom_call.1} parent=1 // pred_fallthru
      _
    %s46 = sadd.s32 0, 0
    %p47 = scmp.lt.s32.totalorder %s46, 0
    %s48 = scalar_select %p47, %s46, 0
    %s49 = sadd.s32 0, 0
    %p50 = scmp.lt.s32.totalorder %s49, 0
    %s51 = scalar_select %p50, %s49, 0
    %p54 = scmp.eq.s32.totalorder 0, 0
    // Predicated region
    $region18: #{tpu_custom_call.1} parent=1 // pred_check
      %p55 = pneg %p54
    $region19: #{tpu_custom_call.1} parent=1 // pred_check_branch
      %57 = sbr.rel (%p55) target = $region21
    $region20: #{tpu_custom_call.1} parent=1 // pred_region
      %vm58 = vcmask 130048
      %59 = vst.msk [vmem:[#allocation7] sm:$0xff] %vm58, 0.0
    $region21: #{tpu_custom_call.1} parent=1 // pred_fallthru
      _
    %v60 = vld [vmem:[#allocation2] sm:$0xff]
    %v61 = vld [vmem:[#allocation5] sm:$0xff]
    %vm62 = vcmp.ge.f32.partialorder %v60, 0.0
    %v63 = vsel %vm62, 1, 0
    %v64 = vcvt.s32.f32 %v63
    %v65 = vpack.c.bf16 %v64, %v64
    %vm66 = vcmp.eq.f32.partialorder %v61, 1.0
    %v67 = vsel %vm66, 1, 0
    %v68 = vcvt.s32.f32 %v67
    %v69 = vpack.c.bf16 %v68, %v68
    %v70 = vmul.bf16 %v65, %v69
    %vm71 = vcmask 64512
    %v73 = vsel %vm71, 1065369472, 0
    %vm75 = vcmask 1043456
    %v77 = vsel %vm75, %v70, 0
    %79 = vmatprep.subr.bf16.mxu0 0
    %80 = vmatpush1.bf16.msra.mxu0 0
    %81 = vmatprep.subr.bf16.mxu0 0
    %82 = vmatpush1.bf16.msra.mxu0 0
    %83 = vmatprep.subr.bf16.mxu0 0
    %84 = vmatpush1.bf16.msra.mxu0 0
    %85 = vmatprep.subr.bf16.mxu0 0
    %86 = vmatpush1.bf16.msra.mxu0 0
    %87 = vmatprep.subr.bf16.mxu0 0
    %88 = vmatpush1.bf16.msra.mxu0 0
    %89 = vmatprep.subr.bf16.mxu0 0
    %90 = vmatpush1.bf16.msra.mxu0 0
    %91 = vmatprep.subr.bf16.mxu0 0
    %92 = vmatpush1.bf16.msra.mxu0 0
    %93 = vmatprep.subr.bf16.mxu0 0
    %94 = vmatpush1.bf16.msra.mxu0 %v77
    %95 = vmatprep.subr.bf16.mxu0 0
    %96 = vmatpush2.bf16.msra.mxu0 0
    %97 = vmatprep.subr.bf16.mxu0 0
    %98 = vmatpush2.bf16.msra.mxu0 0
    %99 = vmatprep.subr.bf16.mxu0 0
    %100 = vmatpush2.bf16.msra.mxu0 0
    %101 = vmatprep.subr.bf16.mxu0 0
    %102 = vmatpush2.bf16.msra.mxu0 0
    %103 = vmatprep.subr.bf16.mxu0 0
    %104 = vmatpush2.bf16.msra.mxu0 0
    %105 = vmatprep.subr.bf16.mxu0 0
    %106 = vmatpush2.bf16.msra.mxu0 0
    %107 = vmatprep.subr.bf16.mxu0 0
    %108 = vmatpush2.bf16.msra.mxu0 0
    %109 = vmatprep.subr.bf16.mxu0 0
    %110 = vmatpush2.bf16.msra.mxu0 0
    %111 = vmatprep.mubr.bf16.mxu0 0
    %112 = vmatmul.mubr.bf16.gmra.mxu0 %v73
    %v113 = vpop.f32.mrf.mxu0
    %v114 = vadd.f32 0.0, %v113
    %v115 = vpop.f32.mrf.mxu0
    %v116 = vpop.f32.mrf.mxu0
    %v117 = vpop.f32.mrf.mxu0
    %118 = vdwg.mxu0
    %v120 = vsel %vm75, %v65, 0
    %122 = vmatprep.subr.bf16.mxu0 0
    %123 = vmatpush1.bf16.msra.mxu0 0
    %124 = vmatprep.subr.bf16.mxu0 0
    %125 = vmatpush1.bf16.msra.mxu0 0
    %126 = vmatprep.subr.bf16.mxu0 0
    %127 = vmatpush1.bf16.msra.mxu0 0
    %128 = vmatprep.subr.bf16.mxu0 0
    %129 = vmatpush1.bf16.msra.mxu0 0
    %130 = vmatprep.subr.bf16.mxu0 0
    %131 = vmatpush1.bf16.msra.mxu0 0
    %132 = vmatprep.subr.bf16.mxu0 0
    %133 = vmatpush1.bf16.msra.mxu0 0
    %134 = vmatprep.subr.bf16.mxu0 0
    %135 = vmatpush1.bf16.msra.mxu0 0
    %136 = vmatprep.subr.bf16.mxu0 0
    %137 = vmatpush1.bf16.msra.mxu0 %v120
    %138 = vmatprep.subr.bf16.mxu0 0
    %139 = vmatpush2.bf16.msra.mxu0 0
    %140 = vmatprep.subr.bf16.mxu0 0
    %141 = vmatpush2.bf16.msra.mxu0 0
    %142 = vmatprep.subr.bf16.mxu0 0
    %143 = vmatpush2.bf16.msra.mxu0 0
    %144 = vmatprep.subr.bf16.mxu0 0
    %145 = vmatpush2.bf16.msra.mxu0 0
    %146 = vmatprep.subr.bf16.mxu0 0
    %147 = vmatpush2.bf16.msra.mxu0 0
    %148 = vmatprep.subr.bf16.mxu0 0
    %149 = vmatpush2.bf16.msra.mxu0 0
    %150 = vmatprep.subr.bf16.mxu0 0
    %151 = vmatpush2.bf16.msra.mxu0 0
    %152 = vmatprep.subr.bf16.mxu0 0
    %153 = vmatpush2.bf16.msra.mxu0 0
    %154 = vmatprep.mubr.bf16.mxu0 0
    %155 = vmatmul.mubr.bf16.gmra.mxu0 %v73
    %v156 = vpop.f32.mrf.mxu0
    %v157 = vadd.f32 0.0, %v156
    %v158 = vpop.f32.mrf.mxu0
    %v159 = vpop.f32.mrf.mxu0
    %v160 = vpop.f32.mrf.mxu0
    %161 = vdwg.mxu0
    %v163 = vsel %vm75, %v69, 0
    %165 = vmatprep.subr.bf16.mxu0 0
    %166 = vmatpush1.bf16.msra.mxu0 0
    %167 = vmatprep.subr.bf16.mxu0 0
    %168 = vmatpush1.bf16.msra.mxu0 0
    %169 = vmatprep.subr.bf16.mxu0 0
    %170 = vmatpush1.bf16.msra.mxu0 0
    %171 = vmatprep.subr.bf16.mxu0 0
    %172 = vmatpush1.bf16.msra.mxu0 0
    %173 = vmatprep.subr.bf16.mxu0 0
    %174 = vmatpush1.bf16.msra.mxu0 0
    %175 = vmatprep.subr.bf16.mxu0 0
    %176 = vmatpush1.bf16.msra.mxu0 0
    %177 = vmatprep.subr.bf16.mxu0 0
    %178 = vmatpush1.bf16.msra.mxu0 0
    %179 = vmatprep.subr.bf16.mxu0 0
    %180 = vmatpush1.bf16.msra.mxu0 %v163
    %181 = vmatprep.subr.bf16.mxu0 0
    %182 = vmatpush2.bf16.msra.mxu0 0
    %183 = vmatprep.subr.bf16.mxu0 0
    %184 = vmatpush2.bf16.msra.mxu0 0
    %185 = vmatprep.subr.bf16.mxu0 0
    %186 = vmatpush2.bf16.msra.mxu0 0
    %187 = vmatprep.subr.bf16.mxu0 0
    %188 = vmatpush2.bf16.msra.mxu0 0
    %189 = vmatprep.subr.bf16.mxu0 0
    %190 = vmatpush2.bf16.msra.mxu0 0
    %191 = vmatprep.subr.bf16.mxu0 0
    %192 = vmatpush2.bf16.msra.mxu0 0
    %193 = vmatprep.subr.bf16.mxu0 0
    %194 = vmatpush2.bf16.msra.mxu0 0
    %195 = vmatprep.subr.bf16.mxu0 0
    %196 = vmatpush2.bf16.msra.mxu0 0
    %197 = vmatprep.mubr.bf16.mxu0 0
    %198 = vmatmul.mubr.bf16.gmra.mxu0 %v73
    %v199 = vpop.f32.mrf.mxu0
    %v200 = vadd.f32 0.0, %v199
    %v201 = vpop.f32.mrf.mxu0
    %v202 = vpop.f32.mrf.mxu0
    %v203 = vpop.f32.mrf.mxu0
    %204 = vdwg.mxu0
    %v205 = vxor.u32 %v60, 2147483648
    %v206 = vmul.f32 %v205, 1.442695
    %v207 = vpow.pop %v206
    %v208 = vadd.f32 %v207, 1.0
    %v209 = vrcp.pop %v208
    %v210 = vmul.f32 1.0, %v209
    %vm211 = vcmp.ne.f32.partialorder %v210, %v61
    %v212 = vsel %vm211, 1, 0
    %v213 = vcvt.s32.f32 %v212
    %v214 = vpack.c.bf16 %v213, %v213
    %vm215 = vcmask 130048
    %v217 = vsel %vm215, %v214, 0
    %219 = vmatprep.subr.bf16.mxu0 0
    %220 = vmatpush1.bf16.msra.mxu0 0
    %221 = vmatprep.subr.bf16.mxu0 0
    %222 = vmatpush1.bf16.msra.mxu0 0
    %223 = vmatprep.subr.bf16.mxu0 0
    %224 = vmatpush1.bf16.msra.mxu0 0
    %225 = vmatprep.subr.bf16.mxu0 0
    %226 = vmatpush1.bf16.msra.mxu0 0
    %227 = vmatprep.subr.bf16.mxu0 0
    %228 = vmatpush1.bf16.msra.mxu0 0
    %229 = vmatprep.subr.bf16.mxu0 0
    %230 = vmatpush1.bf16.msra.mxu0 0
    %231 = vmatprep.subr.bf16.mxu0 0
    %232 = vmatpush1.bf16.msra.mxu0 0
    %233 = vmatprep.subr.bf16.mxu0 0
    %234 = vmatpush1.bf16.msra.mxu0 1065369472
    %235 = vmatprep.subr.bf16.mxu0 0
    %236 = vmatpush2.bf16.msra.mxu0 0
    %237 = vmatprep.subr.bf16.mxu0 0
    %238 = vmatpush2.bf16.msra.mxu0 0
    %239 = vmatprep.subr.bf16.mxu0 0
    %240 = vmatpush2.bf16.msra.mxu0 0
    %241 = vmatprep.subr.bf16.mxu0 0
    %242 = vmatpush2.bf16.msra.mxu0 0
    %243 = vmatprep.subr.bf16.mxu0 0
    %244 = vmatpush2.bf16.msra.mxu0 0
    %245 = vmatprep.subr.bf16.mxu0 0
    %246 = vmatpush2.bf16.msra.mxu0 0
    %247 = vmatprep.subr.bf16.mxu0 0
    %248 = vmatpush2.bf16.msra.mxu0 0
    %249 = vmatprep.subr.bf16.mxu0 0
    %250 = vmatpush2.bf16.msra.mxu0 0
    %251 = vmatprep.mubr.bf16.mxu0 0
    %252 = vmatmul.mubr.bf16.gmra.mxu0 %v217
    %v253 = vpop.f32.mrf.mxu0
    %v254 = vadd.f32 0.0, %v253
    %v255 = vpop.f32.mrf.mxu0
    %v256 = vpop.f32.mrf.mxu0
    %v257 = vpop.f32.mrf.mxu0
    %258 = vdwg.mxu0
    %vm259 = vcmp.eq.f32.partialorder %v254, 0.0
    %v260 = vsel %vm259, 1, 0
    %v261 = vcvt.s32.f32 %v260
    %v262 = vpack.c.bf16 %v261, %v261
    %v264 = vsel %vm75, %v262, 0
    %266 = vmatprep.subr.bf16.mxu0 0
    %267 = vmatpush1.bf16.msra.mxu0 0
    %268 = vmatprep.subr.bf16.mxu0 0
    %269 = vmatpush1.bf16.msra.mxu0 0
    %270 = vmatprep.subr.bf16.mxu0 0
    %271 = vmatpush1.bf16.msra.mxu0 0
    %272 = vmatprep.subr.bf16.mxu0 0
    %273 = vmatpush1.bf16.msra.mxu0 0
    %274 = vmatprep.subr.bf16.mxu0 0
    %275 = vmatpush1.bf16.msra.mxu0 0
    %276 = vmatprep.subr.bf16.mxu0 0
    %277 = vmatpush1.bf16.msra.mxu0 0
    %278 = vmatprep.subr.bf16.mxu0 0
    %279 = vmatpush1.bf16.msra.mxu0 0
    %280 = vmatprep.subr.bf16.mxu0 0
    %281 = vmatpush1.bf16.msra.mxu0 %v264
    %282 = vmatprep.subr.bf16.mxu0 0
    %283 = vmatpush2.bf16.msra.mxu0 0
    %284 = vmatprep.subr.bf16.mxu0 0
    %285 = vmatpush2.bf16.msra.mxu0 0
    %286 = vmatprep.subr.bf16.mxu0 0
    %287 = vmatpush2.bf16.msra.mxu0 0
    %288 = vmatprep.subr.bf16.mxu0 0
    %289 = vmatpush2.bf16.msra.mxu0 0
    %290 = vmatprep.subr.bf16.mxu0 0
    %291 = vmatpush2.bf16.msra.mxu0 0
    %292 = vmatprep.subr.bf16.mxu0 0
    %293 = vmatpush2.bf16.msra.mxu0 0
    %294 = vmatprep.subr.bf16.mxu0 0
    %295 = vmatpush2.bf16.msra.mxu0 0
    %296 = vmatprep.subr.bf16.mxu0 0
    %297 = vmatpush2.bf16.msra.mxu0 0
    %298 = vmatprep.mubr.bf16.mxu0 0
    %299 = vmatmul.mubr.bf16.gmra.mxu0 %v73
    %v300 = vpop.f32.mrf.mxu0
    %v301 = vadd.f32 0.0, %v300
    %v302 = vpop.f32.mrf.mxu0
    %v303 = vpop.f32.mrf.mxu0
    %v304 = vpop.f32.mrf.mxu0
    %305 = vdwg.mxu0
    %v306 = vld [vmem:[#allocation7] sm:$0x1]
    %v307 = vadd.f32 %v306, %v114
    %vm308 = vcmask 122880
    %309 = vst.msk [vmem:[#allocation7] sm:$0x1] %vm308, %v307
    %v310 = vld [vmem:[#allocation7 + $0x1] sm:$0x1]
    %v311 = vadd.f32 %v310, %v157
    %312 = vst.msk [vmem:[#allocation7 + $0x1] sm:$0x1] %vm308, %v311
    %v313 = vld [vmem:[#allocation7 + $0x2] sm:$0x1]
    %v314 = vadd.f32 %v313, %v200
    %315 = vst.msk [vmem:[#allocation7 + $0x2] sm:$0x1] %vm308, %v314
    %v316 = vld [vmem:[#allocation7 + $0x3] sm:$0x1]
    %v317 = vadd.f32 %v316, %v301
    %vm318 = vcmask 0
    %319 = vst.msk [vmem:[#allocation7 + $0x3] sm:$0x1] %vm318, %v317
    // Predicated region
    $region22: #{tpu_custom_call.1} parent=1 // pred_check
      _
    $region23: #{tpu_custom_call.1} parent=1 // pred_check_branch
      %321 = sbr.rel (0) target = $region25
    $region24: #{tpu_custom_call.1} parent=1 // pred_region
      %s323 = ssub.s32 128, 128
      %324 = vsyncadd [#allocation4], %s323
      %s326 = sshll.u32 [#allocation7], 4
      %s327 = int_to_ptr.vmem [resolvable:$true] %s326
      %329 = dma.vmem_to_hbm [thread:$0]  %s327, 128, %s2, [#allocation4]
    $region25: #{tpu_custom_call.1} parent=1 // pred_fallthru
      _
    // Predicated region
    $region26: #{tpu_custom_call.1} parent=1 // pred_check
      _
    $region27: #{tpu_custom_call.1} parent=1 // pred_check_branch
      %331 = sbr.rel (0) target = $region29
    $region28: #{tpu_custom_call.1} parent=1 // pred_region
      %332 = dma.done [#allocation4], 128
    $region29: #{tpu_custom_call.1} parent=1 // pred_fallthru
      _
    %333 = vsyncpa [#allocation3], 1
    %334 = vsyncpa [#allocation6], 1
    %335 = vsyncpa [#allocation4], 1

</llo_original>
